<compile_context>
chip_gen: v6e
topology: v6e:2x2x1
jax: 0.10.0
libtpu: 0.0.40
codegen_flags: <defaults>
</compile_context>

<pallas_src>
import functools

import jax
import jax.numpy as jnp
from jax.experimental import pallas as pl
from jax.experimental.pallas import tpu as pltpu


def postnorm_kernel(x_ref, w_ref, cb_ref, g_ref, b_ref, o_ref, *, eps):
    # x_ref : (Nb, C, ts) tile of the (N, C, H*W) input (spatial on lanes,
    #          channels on sublanes -- native NCHW layout, no HBM transpose)
    # w_ref : (C, C)  1x1 conv weight, (out_ch, in_ch)
    # cb_ref: (C, 1)  conv bias
    # g_ref : (C, 1)  LayerNorm scale
    # b_ref : (C, 1)  LayerNorm shift
    w = w_ref[...]                                   # native dtype (no upcast)
    cb = cb_ref[...].astype(jnp.float32)
    g = g_ref[...].astype(jnp.float32)
    b = b_ref[...].astype(jnp.float32)

    nb = x_ref.shape[0]
    for i in range(nb):                              # static unroll, nb <= 8
        x = x_ref[i]                                 # (C, ts), native dtype
        # fn(x): pointwise (1x1) conv == channel matmul on the MXU, f32 acc.
        y = jnp.dot(w, x, preferred_element_type=jnp.float32) + cb   # (C, ts)
        # Channel LayerNorm: reduce over channels (sublane axis), two-pass,
        # unbiased=False, all statistics in f32.
        mean = jnp.mean(y, axis=0, keepdims=True)                    # (1, ts)
        d = y - mean
        var = jnp.mean(d * d, axis=0, keepdims=True)                 # (1, ts)
        inv = jax.lax.rsqrt(var + eps)                               # EUP
        o_ref[i] = (d * inv * g + b).astype(o_ref.dtype)


def _divisors(n):
    ds = set()
    i = 1
    while i * i <= n:
        if n % i == 0:
            ds.add(i)
            ds.add(n // i)
        i += 1
    return ds


def _physical_vmem_bytes():
    try:
        return int(pltpu.get_tpu_info().vmem_capacity_bytes)
    except Exception:
        return 64 * 1024 * 1024  # conservative default (v7x-class)


def _pick_tiling(N, C, S, itemsize, *, target_bytes=2 << 20, min_steps=16, max_nb=8):
    """Choose (nb, ts): block shape is (nb, C, ts) over the (N, C, S) array.

    - Per-step streamed bytes capped near `target_bytes`: this kernel is
      HBM-bandwidth-bound, so a few-MiB tile already saturates and giant tiles
      only defeat double-buffer overlap.
    - Keep the total grid >= min_steps where the problem allows it (pipelining
      + v7x 2-TC balance).
    - ts is a divisor of S that is lane-dense (multiple of 128) or S itself.
    - If one image fits (ts == S), pack nb whole images per step (one
      contiguous HBM region) without dropping below min_steps.
    """
    col_bytes = C * itemsize
    # Lane-dense spatial tile candidates (descending); O(sqrt(S)) host work.
    cands = sorted({d for d in _divisors(S) if d % 128 == 0} | {S}, reverse=True)
    fitting = [t for t in cands if t * col_bytes <= target_bytes]
    ts = fitting[0] if fitting else cands[-1]        # fallback: smallest candidate
    # Grow the grid if it is too small for good pipelining / core balance.
    while N * (S // ts) < min_steps:
        smaller = [t for t in cands if t < ts]
        if not smaller:
            break
        ts = smaller[0]
    # Small images: pack several whole images per step (contiguous DMA).
    nb = 1
    if ts == S:
        img_bytes = col_bytes * S
        for d in sorted(_divisors(N), reverse=True):
            if (d <= max_nb and d * img_bytes <= target_bytes
                    and (N // d) >= min(min_steps, N)):
                nb = d
                break
    return nb, ts


def postnorm(x_nchw, conv_w, conv_b, g, b, *, eps=1e-5):
    """PostNorm(1x1 conv -> channel LayerNorm) on an NCHW tensor.

    x_nchw: (N, C, H, W). conv_w: (C, C) [out, in]. conv_b, g, b: (C,).
    """
    N, C, H, W = x_nchw.shape
    S = H * W
    itemsize = jnp.dtype(x_nchw.dtype).itemsize

    # Free reshape: merges the trailing contiguous dims; NO HBM transpose.
    x3d = x_nchw.reshape(N, C, S)
    cb2 = conv_b.reshape(C, 1)
    g2 = g.reshape(C, 1)
    b2 = b.reshape(C, 1)

    nb, ts = _pick_tiling(N, C, S, itemsize)
    grid = (N // nb, S // ts)

    # Modest VMEM budget derived from the actual per-step footprint; tiles are
    # only a few MiB so a 32 MiB-class scoped limit is plenty (headroom on
    # v7x's 64 MiB physical VMEM).
    tile_elems = nb * C * ts
    need = (4 * tile_elems * itemsize                       # x + out, double-buffered
            + 6 * tile_elems * 4                            # f32 temporaries
            + 2 * C * C * jnp.dtype(conv_w.dtype).itemsize  # conv weight
            + 16 * C * 4)                                   # per-channel vectors
    vmem_limit = int(min(max(need + (8 << 20), 32 << 20),
                         3 * _physical_vmem_bytes() // 4))

    kernel = functools.partial(postnorm_kernel, eps=eps)
    out3d = pl.pallas_call(
        kernel,
        out_shape=jax.ShapeDtypeStruct((N, C, S), x_nchw.dtype),
        grid_spec=pltpu.PrefetchScalarGridSpec(
            num_scalar_prefetch=0,
            grid=grid,
            in_specs=[
                pl.BlockSpec((nb, C, ts), lambda n, s: (n, 0, s)),  # x tile
                pl.BlockSpec((C, C), lambda n, s: (0, 0)),          # conv weight (grid-invariant)
                pl.BlockSpec((C, 1), lambda n, s: (0, 0)),          # conv bias
                pl.BlockSpec((C, 1), lambda n, s: (0, 0)),          # ln g
                pl.BlockSpec((C, 1), lambda n, s: (0, 0)),          # ln b
            ],
            out_specs=pl.BlockSpec((nb, C, ts), lambda n, s: (n, 0, s)),
        ),
        compiler_params=pltpu.CompilerParams(
            dimension_semantics=("parallel", "parallel"),
            vmem_limit_bytes=vmem_limit,
        ),
    )(x3d, conv_w, cb2, g2, b2)

    # Free reshape back to NCHW.
    return out3d.reshape(N, C, H, W)


def postnorm_ref(x_nchw, conv_w, conv_b, g, b, eps=1e-5):
    """Pure-JAX reference matching the PyTorch module semantics."""
    y = jnp.einsum("nchw,oc->nohw", x_nchw, conv_w) + conv_b[None, :, None, None]
    mean = jnp.mean(y, axis=1, keepdims=True)
    var = jnp.mean((y - mean) ** 2, axis=1, keepdims=True)  # unbiased=False
    return (y - mean) / jnp.sqrt(var + eps) * g[None, :, None, None] \
        + b[None, :, None, None]


if __name__ == "__main__":
    key = jax.random.PRNGKey(0)
    N, C, H, W = 2, 4, 16, 16

    kx, kw, kb = jax.random.split(key, 3)
    x = jax.random.normal(kx, (N, C, H, W), dtype=jnp.float32)

    # fn = Conv2d(C, C, kernel_size=1): deterministic synthetic weights.
    conv_w = jax.random.normal(kw, (C, C), dtype=jnp.float32) * 0.1  # (out, in)
    conv_b = jax.random.normal(kb, (C,), dtype=jnp.float32) * 0.1

    # LayerNorm params as in __init__: g = ones(1,C,1,1), b = zeros(1,C,1,1).
    g = jnp.ones((C,), dtype=jnp.float32)
    b = jnp.zeros((C,), dtype=jnp.float32)

    out = jax.block_until_ready(postnorm(x, conv_w, conv_b, g, b))

    ref = postnorm_ref(x, conv_w, conv_b, g, b)
    assert out.shape == (N, C, H, W)
    assert jnp.allclose(out, ref, atol=1e-5, rtol=1e-5), "mismatch vs reference"

    print("KERNEL_OK")
</pallas_src>

<mosaic_0001>
module attributes {stable_mosaic.version = 11 : i64} {
  func.func @postnorm_kernel(%arg0: i32, %arg1: i32, %arg2: memref<1x4x128xf32, #tpu.memory_space<vmem>>, %arg3: memref<4x4xf32, #tpu.memory_space<vmem>>, %arg4: memref<4x1xf32, #tpu.memory_space<vmem>>, %arg5: memref<4x1xf32, #tpu.memory_space<vmem>>, %arg6: memref<4x1xf32, #tpu.memory_space<vmem>>, %arg7: memref<1x4x128xf32, #tpu.memory_space<vmem>>) attributes {dimension_semantics = [#tpu.dimension_semantics<parallel>, #tpu.dimension_semantics<parallel>], iteration_bounds = array<i64: 2, 2>, scalar_prefetch = 0 : i64, scratch_operands = 0 : i64, tpu.core_type = #tpu.core_type<tc>, window_params = [{transform_indices = @transform_0, window_bounds = array<i64: 1, 4, 128>}, {pipeline_mode = #tpu.pipeline_mode<synchronous>, transform_indices = @transform_1, window_bounds = array<i64: 4, 4>}, {pipeline_mode = #tpu.pipeline_mode<synchronous>, transform_indices = @transform_2, window_bounds = array<i64: 4, 1>}, {pipeline_mode = #tpu.pipeline_mode<synchronous>, transform_indices = @transform_3, window_bounds = array<i64: 4, 1>}, {pipeline_mode = #tpu.pipeline_mode<synchronous>, transform_indices = @transform_4, window_bounds = array<i64: 4, 1>}, {transform_indices = @transform_5, window_bounds = array<i64: 1, 4, 128>}]} {
    %c0 = arith.constant 0 : index
    %c0_0 = arith.constant 0 : index
    %0 = vector.load %arg3[%c0, %c0_0] : memref<4x4xf32, #tpu.memory_space<vmem>>, vector<4x4xf32>
    %c0_1 = arith.constant 0 : index
    %c0_2 = arith.constant 0 : index
    %1 = vector.load %arg4[%c0_1, %c0_2] : memref<4x1xf32, #tpu.memory_space<vmem>>, vector<4x1xf32>
    %c0_3 = arith.constant 0 : index
    %c0_4 = arith.constant 0 : index
    %2 = vector.load %arg5[%c0_3, %c0_4] : memref<4x1xf32, #tpu.memory_space<vmem>>, vector<4x1xf32>
    %c0_5 = arith.constant 0 : index
    %c0_6 = arith.constant 0 : index
    %3 = vector.load %arg6[%c0_5, %c0_6] : memref<4x1xf32, #tpu.memory_space<vmem>>, vector<4x1xf32>
    %c0_7 = arith.constant 0 : index
    %c0_8 = arith.constant 0 : index
    %c0_9 = arith.constant 0 : index
    %4 = vector.load %arg2[%c0_7, %c0_8, %c0_9] : memref<1x4x128xf32, #tpu.memory_space<vmem>>, vector<1x4x128xf32>
    %5 = vector.shape_cast %4 : vector<1x4x128xf32> to vector<4x128xf32>
    %cst = arith.constant dense<0.000000e+00> : vector<4x128xf32>
    %6 = tpu.matmul %0, %5, %cst {dimension_numbers = #tpu.dot_dimension_numbers<[1], [0], [0], [1], [0, 0, 1, 1], [], []>} : vector<4x4xf32>, vector<4x128xf32>, vector<4x128xf32> -> vector<4x128xf32>
    %7 = vector.broadcast %1 : vector<4x1xf32> to vector<4x128xf32>
    %8 = arith.addf %6, %7 : vector<4x128xf32>
    %cst_10 = arith.constant dense<0.000000e+00> : vector<128xf32>
    %9 = vector.multi_reduction <add>, %8, %cst_10 [0] : vector<4x128xf32> to vector<128xf32>
    %10 = vector.shape_cast %9 : vector<128xf32> to vector<1x128xf32>
    %cst_11 = arith.constant 4.000000e+00 : f32
    %11 = vector.broadcast %cst_11 : f32 to vector<1x128xf32>
    %12 = arith.divf %10, %11 : vector<1x128xf32>
    %13 = vector.broadcast %12 : vector<1x128xf32> to vector<4x128xf32>
    %14 = arith.subf %8, %13 : vector<4x128xf32>
    %15 = arith.mulf %14, %14 : vector<4x128xf32>
    %cst_12 = arith.constant dense<0.000000e+00> : vector<128xf32>
    %16 = vector.multi_reduction <add>, %15, %cst_12 [0] : vector<4x128xf32> to vector<128xf32>
    %17 = vector.shape_cast %16 : vector<128xf32> to vector<1x128xf32>
    %cst_13 = arith.constant 4.000000e+00 : f32
    %18 = vector.broadcast %cst_13 : f32 to vector<1x128xf32>
    %19 = arith.divf %17, %18 : vector<1x128xf32>
    %cst_14 = arith.constant 9.99999974E-6 : f32
    %20 = vector.broadcast %cst_14 : f32 to vector<1x128xf32>
    %21 = arith.addf %19, %20 : vector<1x128xf32>
    %22 = math.rsqrt %21 : vector<1x128xf32>
    %23 = vector.broadcast %22 : vector<1x128xf32> to vector<4x128xf32>
    %24 = arith.mulf %14, %23 : vector<4x128xf32>
    %25 = vector.broadcast %2 : vector<4x1xf32> to vector<4x128xf32>
    %26 = arith.mulf %24, %25 : vector<4x128xf32>
    %27 = vector.broadcast %3 : vector<4x1xf32> to vector<4x128xf32>
    %28 = arith.addf %26, %27 : vector<4x128xf32>
    %c0_15 = arith.constant 0 : index
    %c0_16 = arith.constant 0 : index
    %c0_17 = arith.constant 0 : index
    %29 = vector.load %arg7[%c0_15, %c0_16, %c0_17] : memref<1x4x128xf32, #tpu.memory_space<vmem>>, vector<1x4x128xf32>
    %30 = vector.shape_cast %29 : vector<1x4x128xf32> to vector<4x128xf32>
    %31 = vector.shape_cast %28 : vector<4x128xf32> to vector<1x4x128xf32>
    tpu.vector_store %arg7[%c0_15, %c0_16, %c0_17], %31 {strides = array<i32>} : memref<1x4x128xf32, #tpu.memory_space<vmem>>, vector<1x4x128xf32>,
    return
  }
  func.func @transform_0(%arg0: i32, %arg1: i32) -> (i32, i32, i32) {
    %c0_i32 = arith.constant 0 : i32
    %c0_i32_0 = arith.constant 0 : i32
    return %arg0, %c0_i32, %arg1 : i32, i32, i32
  }
  func.func @transform_1(%arg0: i32, %arg1: i32) -> (i32, i32) {
    %c0_i32 = arith.constant 0 : i32
    %c0_i32_0 = arith.constant 0 : i32
    %c0_i32_1 = arith.constant 0 : i32
    return %c0_i32, %c0_i32_0 : i32, i32
  }
  func.func @transform_2(%arg0: i32, %arg1: i32) -> (i32, i32) {
    %c0_i32 = arith.constant 0 : i32
    %c0_i32_0 = arith.constant 0 : i32
    %c0_i32_1 = arith.constant 0 : i32
    return %c0_i32, %c0_i32_0 : i32, i32
  }
  func.func @transform_3(%arg0: i32, %arg1: i32) -> (i32, i32) {
    %c0_i32 = arith.constant 0 : i32
    %c0_i32_0 = arith.constant 0 : i32
    %c0_i32_1 = arith.constant 0 : i32
    return %c0_i32, %c0_i32_0 : i32, i32
  }
  func.func @transform_4(%arg0: i32, %arg1: i32) -> (i32, i32) {
    %c0_i32 = arith.constant 0 : i32
    %c0_i32_0 = arith.constant 0 : i32
    %c0_i32_1 = arith.constant 0 : i32
    return %c0_i32, %c0_i32_0 : i32, i32
  }
  func.func @transform_5(%arg0: i32, %arg1: i32) -> (i32, i32, i32) {
    %c0_i32 = arith.constant 0 : i32
    %c0_i32_0 = arith.constant 0 : i32
    return %arg0, %c0_i32, %arg1 : i32, i32, i32
  }
}

</mosaic_0001>

<llo_original>
// kernel: tpu_custom_call.1
$region0: #{tpu_custom_call.1}
  #allocation0 [shape = 'u32[]', space=smem, size = 0x4, offset = 0x4, fixed_abs, tag = 'smem constant byte address 0x4 - core index']
  #allocation1 [shape = 'u32[144,128]{1,0:T(1,128)}', space=vmem, size = 0x12000, scoped, tag = 'internal scratch']
  %s0 = inlined_call_operand.hbm [shape: f32[2,4,256], index: 0, kind: input, shape index: {}]
  %s1 = inlined_call_operand.vmem [shape: f32[4,4], index: 1, kind: input, shape index: {}]
  %s2 = inlined_call_operand.vmem [shape: f32[4,1], index: 2, kind: input, shape index: {}]
  %s3 = inlined_call_operand.vmem [shape: f32[4,1], index: 3, kind: input, shape index: {}]
  %s4 = inlined_call_operand.vmem [shape: f32[4,1], index: 4, kind: input, shape index: {}]
  %s5 = inlined_call_operand.hbm [shape: f32[2,4,256], index: 5, kind: output, shape index: {}]
  %s6 = sld [smem:[#allocation0]]
  $region57: #{tpu_custom_call.1} parent=0
    _
  %s8 = ssub.s32 1, %s6
  %s9 = scalar_select 0, %s8, %s6
  $region1: #{tpu_custom_call.1} parent=0
    #allocation2 [shape = 'u8[4096]{0}', space=vmem, size = 0x1000, scoped, tag = 'input window, operand 0']
    #allocation3 [shape = 's32[2]{0}', space=sflag, size = 0x8, scoped, tag = 'scoped memory for tpu_custom_call.1']
    #allocation4 [shape = 's32[2]{0}', space=sflag, size = 0x8, scoped, tag = 'scoped memory for tpu_custom_call.1']
    #allocation5 [shape = 'u8[4096]{0}', space=vmem, size = 0x1000, scoped, tag = 'output window, operand 0']
    %10 = vsyncpa [#allocation3], 0
    %s11 = scalar_lea.sflag [#allocation3], 1
    %12 = vsyncpa %s11, 0
    %13 = vsyncpa [#allocation4], 0
    %s14 = scalar_lea.sflag [#allocation4], 1
    %15 = vsyncpa %s14, 0
    loop: start=0, step=1, limit=6
    $region2: #{tpu_custom_call.1} parent=1 // loop_pre_header
      _
    $region3: #{tpu_custom_call.1} parent=1 // loop_header
      %s17 = sphi 0, %s21
      %p18 = scmp.ge.s32.totalorder %s17, 6
      %s24 = sphi 0, %s36
      %s25 = sphi 0, %s32
      %s26 = sphi 0, %s24
      %s27 = sphi 0, %s25
      %s28 = sphi 0, %s26
      %s29 = sphi 0, %s27
      %s41 = sphi 0, %s43
      %s44 = sphi 0, %s41
      %s45 = sphi 0, %s44
      %s61 = sphi 0, %s45
      %s65 = sphi 0, %s65
      %s67 = sphi 0, %s65
      %s68 = sphi 0, %s67
      %s82 = sphi 0, %s68
      %s86 = sphi 0, %s86
      %s88 = sphi 0, %s86
      %s89 = sphi 0, %s88
      %s103 = sphi 0, %s89
      %s107 = sphi 0, %s107
      %s109 = sphi 0, %s107
      %s110 = sphi 0, %s109
      %s124 = sphi 0, %s110
      %s128 = sphi 0, %s128
      %s130 = sphi 0, %s128
      %s131 = sphi 0, %s130
      %s145 = sphi 0, %s131
      %s153 = sphi 0, %s155
      %s156 = sphi 0, %s153
      %s157 = sphi 0, %s156
      %s173 = sphi 0, %s157
    $region4: #{tpu_custom_call.1} parent=1 // loop_header_branch
      %20 = sbr.rel (%p18) target = $region8
    $region5: #{tpu_custom_call.1} parent=1 // loop_body
      %s22 = ssub.s32 %s17, 1
      %s23 = ssub.s32 %s17, 2
      %s30 = sadd.s32 1, %s25
      %p31 = scmp.ge.s32.totalorder %s30, 2
      %s32 = scalar_select %p31, 0, %s30
      %s33 = sadd.s32 1, %s24
      %s34 = scalar_select %p31, %s33, %s24
      %p35 = scmp.ge.s32.totalorder %s34, 2
      %s36 = scalar_select %p35, 0, %s34
      %s37 = ssub.s32 %s24, %s36
      %s38 = ssub.s32 %s25, %s32
      %s39 = sor.u32 %s37, %s38
      %p40 = scmp.eq.s32.totalorder %s39, 0
      %s42 = sadd.s32 %s41, 1
      %s43 = scalar_select %p40, %s41, %s42
      %p46 = pneg %p40
      %p47 = scmp.eq.s32.totalorder %s17, 3
      %p48 = por %p46, %p47
      %p49 = scmp.ne.s32.totalorder %s41, %s44
      %p50 = scmp.eq.s32.totalorder %s17, 0
      %p51 = por %p49, %p50
      %p52 = scmp.ne.s32.totalorder %s41, %s44
      %p53 = scmp.eq.s32.totalorder %s22, 3
      %p54 = por %p52, %p53
      %p55 = scmp.ne.s32.totalorder %s44, %s45
      %p56 = scmp.eq.s32.totalorder %s22, 0
      %p57 = por %p55, %p56
      %p58 = scmp.ne.s32.totalorder %s44, %s45
      %p59 = scmp.eq.s32.totalorder %s23, 3
      %p60 = por %p58, %p59
      %p62 = scmp.ne.s32.totalorder %s45, %s61
      %p63 = scmp.eq.s32.totalorder %s23, 0
      %p64 = por %p62, %p63
      %s66 = sadd.s32 %s65, 1
      %p69 = scmp.eq.s32.totalorder %s17, 3
      %p70 = scmp.ne.s32.totalorder %s65, %s67
      %p71 = scmp.eq.s32.totalorder %s17, 0
      %p72 = por %p70, %p71
      %p73 = scmp.ne.s32.totalorder %s65, %s67
      %p74 = scmp.eq.s32.totalorder %s22, 3
      %p75 = por %p73, %p74
      %p76 = scmp.ne.s32.totalorder %s67, %s68
      %p77 = scmp.eq.s32.totalorder %s22, 0
      %p78 = por %p76, %p77
      %p79 = scmp.ne.s32.totalorder %s67, %s68
      %p80 = scmp.eq.s32.totalorder %s23, 3
      %p81 = por %p79, %p80
      %p83 = scmp.ne.s32.totalorder %s68, %s82
      %p84 = scmp.eq.s32.totalorder %s23, 0
      %p85 = por %p83, %p84
      %s87 = sadd.s32 %s86, 1
      %p90 = scmp.eq.s32.totalorder %s17, 3
      %p91 = scmp.ne.s32.totalorder %s86, %s88
      %p92 = scmp.eq.s32.totalorder %s17, 0
      %p93 = por %p91, %p92
      %p94 = scmp.ne.s32.totalorder %s86, %s88
      %p95 = scmp.eq.s32.totalorder %s22, 3
      %p96 = por %p94, %p95
      %p97 = scmp.ne.s32.totalorder %s88, %s89
      %p98 = scmp.eq.s32.totalorder %s22, 0
      %p99 = por %p97, %p98
      %p100 = scmp.ne.s32.totalorder %s88, %s89
      %p101 = scmp.eq.s32.totalorder %s23, 3
      %p102 = por %p100, %p101
      %p104 = scmp.ne.s32.totalorder %s89, %s103
      %p105 = scmp.eq.s32.totalorder %s23, 0
      %p106 = por %p104, %p105
      %s108 = sadd.s32 %s107, 1
      %p111 = scmp.eq.s32.totalorder %s17, 3
      %p112 = scmp.ne.s32.totalorder %s107, %s109
      %p113 = scmp.eq.s32.totalorder %s17, 0
      %p114 = por %p112, %p113
      %p115 = scmp.ne.s32.totalorder %s107, %s109
      %p116 = scmp.eq.s32.totalorder %s22, 3
      %p117 = por %p115, %p116
      %p118 = scmp.ne.s32.totalorder %s109, %s110
      %p119 = scmp.eq.s32.totalorder %s22, 0
      %p120 = por %p118, %p119
      %p121 = scmp.ne.s32.totalorder %s109, %s110
      %p122 = scmp.eq.s32.totalorder %s23, 3
      %p123 = por %p121, %p122
      %p125 = scmp.ne.s32.totalorder %s110, %s124
      %p126 = scmp.eq.s32.totalorder %s23, 0
      %p127 = por %p125, %p126
      %s129 = sadd.s32 %s128, 1
      %p132 = scmp.eq.s32.totalorder %s17, 3
      %p133 = scmp.ne.s32.totalorder %s128, %s130
      %p134 = scmp.eq.s32.totalorder %s17, 0
      %p135 = por %p133, %p134
      %p136 = scmp.ne.s32.totalorder %s128, %s130
      %p137 = scmp.eq.s32.totalorder %s22, 3
      %p138 = por %p136, %p137
      %p139 = scmp.ne.s32.totalorder %s130, %s131
      %p140 = scmp.eq.s32.totalorder %s22, 0
      %p141 = por %p139, %p140
      %p142 = scmp.ne.s32.totalorder %s130, %s131
      %p143 = scmp.eq.s32.totalorder %s23, 3
      %p144 = por %p142, %p143
      %p146 = scmp.ne.s32.totalorder %s131, %s145
      %p147 = scmp.eq.s32.totalorder %s23, 0
      %p148 = por %p146, %p147
      %s149 = ssub.s32 %s24, %s36
      %s150 = ssub.s32 %s25, %s32
      %s151 = sor.u32 %s149, %s150
      %p152 = scmp.eq.s32.totalorder %s151, 0
      %s154 = sadd.s32 %s153, 1
      %s155 = scalar_select %p152, %s153, %s154
      %p158 = pneg %p152
      %p159 = scmp.eq.s32.totalorder %s17, 3
      %p160 = por %p158, %p159
      %p161 = scmp.ne.s32.totalorder %s153, %s156
      %p162 = scmp.eq.s32.totalorder %s17, 0
      %p163 = por %p161, %p162
      %p164 = scmp.ne.s32.totalorder %s153, %s156
      %p165 = scmp.eq.s32.totalorder %s22, 3
      %p166 = por %p164, %p165
      %p167 = scmp.ne.s32.totalorder %s156, %s157
      %p168 = scmp.eq.s32.totalorder %s22, 0
      %p169 = por %p167, %p168
      %p170 = scmp.ne.s32.totalorder %s156, %s157
      %p171 = scmp.eq.s32.totalorder %s23, 3
      %p172 = por %p170, %p171
      %p174 = scmp.ne.s32.totalorder %s157, %s173
      %p175 = scmp.eq.s32.totalorder %s23, 0
      %p176 = por %p174, %p175
      %p177 = scmp.le.s32.totalorder 1, %s17
      %p178 = scmp.lt.s32.totalorder %s17, 5
      %p179 = pnand %p177, %p178
      %p180 = pneg %p179
      // Predicated region
      $region9: #{tpu_custom_call.1} parent=5 // pred_check
        _
      $region10: #{tpu_custom_call.1} parent=5 // pred_check_branch
        %182 = sbr.rel (%p179) target = $region12
      $region11: #{tpu_custom_call.1} parent=5 // pred_region
        %s183 = ssub.s32 %s17, 1
        // Predicated region
        $region13: #{tpu_custom_call.1} parent=11 // pred_check
          %p184 = pneg %p78
        $region14: #{tpu_custom_call.1} parent=11 // pred_check_branch
          %186 = sbr.rel (%p184) target = $region16
        $region15: #{tpu_custom_call.1} parent=11 // pred_region
          _
        $region16: #{tpu_custom_call.1} parent=11 // pred_fallthru
          _
        // Predicated region
        $region17: #{tpu_custom_call.1} parent=11 // pred_check
          %p187 = pneg %p99
        $region18: #{tpu_custom_call.1} parent=11 // pred_check_branch
          %189 = sbr.rel (%p187) target = $region20
        $region19: #{tpu_custom_call.1} parent=11 // pred_region
          _
        $region20: #{tpu_custom_call.1} parent=11 // pred_fallthru
          _
        // Predicated region
        $region21: #{tpu_custom_call.1} parent=11 // pred_check
          %p190 = pneg %p120
        $region22: #{tpu_custom_call.1} parent=11 // pred_check_branch
          %192 = sbr.rel (%p190) target = $region24
        $region23: #{tpu_custom_call.1} parent=11 // pred_region
          _
        $region24: #{tpu_custom_call.1} parent=11 // pred_fallthru
          _
        // Predicated region
        $region25: #{tpu_custom_call.1} parent=11 // pred_check
          %p193 = pneg %p141
        $region26: #{tpu_custom_call.1} parent=11 // pred_check_branch
          %195 = sbr.rel (%p193) target = $region28
        $region27: #{tpu_custom_call.1} parent=11 // pred_region
          _
        $region28: #{tpu_custom_call.1} parent=11 // pred_fallthru
          _
      $region12: #{tpu_custom_call.1} parent=5 // pred_fallthru
        _
      %p196 = scmp.lt.s32.totalorder %s17, 4
      // Predicated region
      $region29: #{tpu_custom_call.1} parent=5 // pred_check
        %p197 = pneg %p196
      $region30: #{tpu_custom_call.1} parent=5 // pred_check_branch
        %199 = sbr.rel (%p197) target = $region32
      $region31: #{tpu_custom_call.1} parent=5 // pred_region
        // Predicated region
        $region33: #{tpu_custom_call.1} parent=31 // pred_check
          %p200 = pneg %p51
        $region34: #{tpu_custom_call.1} parent=31 // pred_check_branch
          %202 = sbr.rel (%p200) target = $region36
        $region35: #{tpu_custom_call.1} parent=31 // pred_region
          %s203 = sand.u32 %s41, 1
          %s204 = scalar_lea.sflag [#allocation3], %s203
          %s205 = sand.u32 %s41, 1
          %s206 = smul.addr %s205, 4
          %s207 = scalar_lea.vmem [#allocation2], %s206
          %s209 = ssub.s32 64, 64
          %210 = vsyncadd %s204, %s209
          %s211 = smul.addr %s24, 2
          %s212 = sadd.s32 %s25, %s211
          %s213 = smul.addr %s212, 64
          %s214 = scalar_lea.hbm %s0, %s213
          %s216 = sshll.u32 %s207, 4
          %s217 = int_to_ptr.vmem [resolvable:$true] %s216
          %219 = dma.hbm_to_vmem [thread:$0]  %s214, 64, %s217, %s204
        $region36: #{tpu_custom_call.1} parent=31 // pred_fallthru
          _
      $region32: #{tpu_custom_call.1} parent=5 // pred_fallthru
        _
      %p220 = scmp.le.s32.totalorder 1, %s17
      %p221 = scmp.lt.s32.totalorder %s17, 5
      %p222 = pnand %p220, %p221
      %p223 = pneg %p222
      // Predicated region
      $region37: #{tpu_custom_call.1} parent=5 // pred_check
        _
      $region38: #{tpu_custom_call.1} parent=5 // pred_check_branch
        %225 = sbr.rel (%p222) target = $region40
      $region39: #{tpu_custom_call.1} parent=5 // pred_region
        %s226 = ssub.s32 %s17, 1
        %s227 = sand.u32 %s44, 1
        %s228 = scalar_lea.sflag [#allocation3], %s227
        %s229 = sand.u32 %s44, 1
        %s230 = smul.addr %s229, 4
        %s231 = scalar_lea.vmem [#allocation2], %s230
        // Predicated region
        $region41: #{tpu_custom_call.1} parent=39 // pred_check
          %p232 = pneg %p57
        $region42: #{tpu_custom_call.1} parent=39 // pred_check_branch
          %234 = sbr.rel (%p232) target = $region44
        $region43: #{tpu_custom_call.1} parent=39 // pred_region
          %235 = dma.done %s228, 64
        $region44: #{tpu_custom_call.1} parent=39 // pred_fallthru
          _
        %s236 = sand.u32 %s44, 1
        %s237 = scalar_lea.sflag [#allocation3], %s236
        %s238 = sand.u32 %s44, 1
        %s239 = smul.addr %s238, 4
        %s240 = scalar_lea.vmem [#allocation2], %s239
        %p241 = pneg %p57
        %p242 = pneg %p54
        %p243 = pneg %p78
        %p244 = pneg %p75
        %p245 = pneg %p99
        %p246 = pneg %p96
        %p247 = pneg %p120
        %p248 = pneg %p117
        %p249 = pneg %p141
        %p250 = pneg %p138
        %p251 = pneg %p169
        %p252 = pneg %p166
        %s253 = sand.u32 %s156, 1
        %s254 = scalar_lea.sflag [#allocation4], %s253
        %s255 = sand.u32 %s156, 1
        %s256 = smul.addr %s255, 4
        %s257 = scalar_lea.vmem [#allocation5], %s256
        %v258 = vld [vmem:[%s1] sm:$0xf]
        %v259 = vld [vmem:[%s2] sm:$0xf]
        %v260 = vld [vmem:[%s3] sm:$0xf]
        %v261 = vld [vmem:[%s4] sm:$0xf]
        %v262 = vld [vmem:[%s231] sm:$0xf]
        %264 = vset.pattern.permute.xlu0 0
        %265 = vperm.xlu0 %264, %v259
        %v266 = vpop.permute.xlu0 %265
        %vm268 = vcmask 31744
        %v270 = vsel %vm268, %v258, 0
        %vm272 = vcmask 1043456
        %v274 = vsel %vm272, %v262, 0
        %276 = vmatprep.subr.mxu0 0.0
        %277 = vmatpush1.msra.mxu0 0.0
        %278 = vmatprep.subr.mxu0 0.0
        %279 = vmatpush1.msra.mxu0 0.0
        %280 = vmatprep.subr.mxu0 0.0
        %281 = vmatpush1.msra.mxu0 0.0
        %282 = vmatprep.subr.mxu0 0.0
        %283 = vmatpush1.msra.mxu0 0.0
        %284 = vmatprep.subr.mxu0 0.0
        %285 = vmatpush1.msra.mxu0 0.0
        %286 = vmatprep.subr.mxu0 0.0
        %287 = vmatpush1.msra.mxu0 0.0
        %288 = vmatprep.subr.mxu0 0.0
        %289 = vmatpush1.msra.mxu0 0.0
        %290 = vmatprep.subr.mxu0 0.0
        %291 = vmatpush1.msra.mxu0 0.0
        %292 = vmatprep.subr.mxu0 0.0
        %293 = vmatpush1.msra.mxu0 0.0
        %294 = vmatprep.subr.mxu0 0.0
        %295 = vmatpush1.msra.mxu0 0.0
        %296 = vmatprep.subr.mxu0 0.0
        %297 = vmatpush1.msra.mxu0 0.0
        %298 = vmatprep.subr.mxu0 0.0
        %299 = vmatpush1.msra.mxu0 0.0
        %300 = vmatprep.subr.mxu0 0.0
        %301 = vmatpush1.msra.mxu0 0.0
        %302 = vmatprep.subr.mxu0 0.0
        %303 = vmatpush1.msra.mxu0 0.0
        %304 = vmatprep.subr.mxu0 0.0
        %305 = vmatpush1.msra.mxu0 0.0
        %306 = vmatprep.subr.mxu0 0.0
        %307 = vmatpush1.msra.mxu0 %v274
        %308 = vmatprep.subr.mxu0 0.0
        %309 = vmatpush2.msra.mxu0 0.0
        %310 = vmatprep.subr.mxu0 0.0
        %311 = vmatpush2.msra.mxu0 0.0
        %312 = vmatprep.subr.mxu0 0.0
        %313 = vmatpush2.msra.mxu0 0.0
        %314 = vmatprep.subr.mxu0 0.0
        %315 = vmatpush2.msra.mxu0 0.0
        %316 = vmatprep.subr.mxu0 0.0
        %317 = vmatpush2.msra.mxu0 0.0
        %318 = vmatprep.subr.mxu0 0.0
        %319 = vmatpush2.msra.mxu0 0.0
        %320 = vmatprep.subr.mxu0 0.0
        %321 = vmatpush2.msra.mxu0 0.0
        %322 = vmatprep.subr.mxu0 0.0
        %323 = vmatpush2.msra.mxu0 0.0
        %324 = vmatprep.subr.mxu0 0.0
        %325 = vmatpush2.msra.mxu0 0.0
        %326 = vmatprep.subr.mxu0 0.0
        %327 = vmatpush2.msra.mxu0 0.0
        %328 = vmatprep.subr.mxu0 0.0
        %329 = vmatpush2.msra.mxu0 0.0
        %330 = vmatprep.subr.mxu0 0.0
        %331 = vmatpush2.msra.mxu0 0.0
        %332 = vmatprep.subr.mxu0 0.0
        %333 = vmatpush2.msra.mxu0 0.0
        %334 = vmatprep.subr.mxu0 0.0
        %335 = vmatpush2.msra.mxu0 0.0
        %336 = vmatprep.subr.mxu0 0.0
        %337 = vmatpush2.msra.mxu0 0.0
        %338 = vmatprep.subr.mxu0 0.0
        %339 = vmatpush2.msra.mxu0 0.0
        %340 = vmatprep.mubr.f32.mxu0 0.0
        %341 = vmatmul.mubr.f32.gmra.mxu0 %v270
        %v342 = vpop.f32.mrf.mxu0
        %v343 = vadd.f32 %v266, %v342
        %v344 = vpop.f32.mrf.mxu0
        %345 = vdwg.mxu0
        %v346 = vsel %vm272, %v343, 0.0
        %v347 = vrot.slane %v346, 4
        %v348 = vadd.f32 %v346, %v347
        %v349 = vrot.slane %v348, 2
        %v350 = vadd.f32 %v348, %v349
        %v351 = vrot.slane %v350, 1
        %v352 = vadd.f32 %v350, %v351
        %v353 = vrcp.pop 4.0
        %v354 = vmul.f32 %v352, %v353
        %v355 = vsub.f32 %v343, %v354
        %v356 = vmul.f32 %v355, %v355
        %v357 = vsel %vm272, %v356, 0.0
        %v358 = vrot.slane %v357, 4
        %v359 = vadd.f32 %v357, %v358
        %v360 = vrot.slane %v359, 2
        %v361 = vadd.f32 %v359, %v360
        %v362 = vrot.slane %v361, 1
        %v363 = vadd.f32 %v361, %v362
        %v364 = vmul.f32 %v363, %v353
        %v365 = vadd.f32 %v364, 1e-05
        %v366 = vrsqrt.pop %v365
        %v367 = vmul.f32 %v355, %v366
        %369 = vset.pattern.permute.xlu0 0
        %370 = vperm.xlu0 %369, %v260
        %v371 = vpop.permute.xlu0 %370
        %v373 = vmul.f32 %v367, %v371
        %375 = vset.pattern.permute.xlu0 0
        %376 = vperm.xlu0 %375, %v261
        %v377 = vpop.permute.xlu0 %376
        %v379 = vadd.f32 %v373, %v377
        %380 = vst [vmem:[%s257] sm:$0xf] %v379
        %s381 = sand.u32 %s156, 1
        %s382 = scalar_lea.sflag [#allocation4], %s381
        %s383 = sand.u32 %s156, 1
        %s384 = smul.addr %s383, 4
        %s385 = scalar_lea.vmem [#allocation5], %s384
        // Predicated region
        $region45: #{tpu_custom_call.1} parent=39 // pred_check
          %p386 = pneg %p166
        $region46: #{tpu_custom_call.1} parent=39 // pred_check_branch
          %388 = sbr.rel (%p386) target = $region48
        $region47: #{tpu_custom_call.1} parent=39 // pred_region
          %s390 = ssub.s32 64, 64
          %391 = vsyncadd %s382, %s390
          %s392 = smul.addr %s26, 2
          %s393 = sadd.s32 %s27, %s392
          %s394 = smul.addr %s393, 64
          %s395 = scalar_lea.hbm %s5, %s394
          %s397 = sshll.u32 %s385, 4
          %s398 = int_to_ptr.vmem [resolvable:$true] %s397
          %400 = dma.vmem_to_hbm [thread:$0]  %s398, 64, %s395, %s382
        $region48: #{tpu_custom_call.1} parent=39 // pred_fallthru
          _
      $region40: #{tpu_custom_call.1} parent=5 // pred_fallthru
        _
      %p401 = scmp.le.s32.totalorder 2, %s17
      // Predicated region
      $region49: #{tpu_custom_call.1} parent=5 // pred_check
        %p402 = pneg %p401
      $region50: #{tpu_custom_call.1} parent=5 // pred_check_branch
        %404 = sbr.rel (%p402) target = $region52
      $region51: #{tpu_custom_call.1} parent=5 // pred_region
        %s405 = ssub.s32 %s17, 2
        // Predicated region
        $region53: #{tpu_custom_call.1} parent=51 // pred_check
          %p406 = pneg %p172
        $region54: #{tpu_custom_call.1} parent=51 // pred_check_branch
          %408 = sbr.rel (%p406) target = $region56
        $region55: #{tpu_custom_call.1} parent=51 // pred_region
          %s409 = sand.u32 %s157, 1
          %s410 = scalar_lea.sflag [#allocation4], %s409
          %s411 = sand.u32 %s157, 1
          %s412 = smul.addr %s411, 4
          %s413 = scalar_lea.vmem [#allocation5], %s412
          %414 = dma.done %s410, 64
        $region56: #{tpu_custom_call.1} parent=51 // pred_fallthru
          _
      $region52: #{tpu_custom_call.1} parent=5 // pred_fallthru
        _
    $region6: #{tpu_custom_call.1} parent=1 // loop_footer
      %s21 = sadd.s32 1, %s17
    $region7: #{tpu_custom_call.1} parent=1 // loop_footer_branch
      %16 = sbr.rel target = $region3
    $region8: #{tpu_custom_call.1} parent=1 // loop_exit
      _
    %415 = vsyncpa [#allocation3], 1
    %s416 = scalar_lea.sflag [#allocation3], 1
    %417 = vsyncpa %s416, 1
    %418 = vsyncpa [#allocation4], 1
    %s419 = scalar_lea.sflag [#allocation4], 1
    %420 = vsyncpa %s419, 1

</llo_original>
